<compile_context>
chip_gen: v7x
topology: tpu7x:2x2x1
jax: 0.10.0
libtpu: 0.0.40
codegen_flags: <defaults>
</compile_context>

<pallas_src>
import math

import jax
import jax.numpy as jnp
from jax import lax
from jax.experimental import pallas as pl
from jax.experimental.pallas import tpu as pltpu


def _one_linear_kernel(idx_ref, table_ref, o_ref):
    # idx_ref:   (R, L)      int32 batch indices, sublane x lane dense
    # table_ref: (n_pad, L)  f32 lane-dense bias table (VMEM resident across grid)
    # o_ref:     (R, L)      output block (weight dtype)
    idx = idx_ref[...]                       # (R, L)
    table = table_ref[...]                   # (n_pad, L)
    n_pad, L = table.shape
    R = idx.shape[0]

    # One-hot gather with the table axis leading: mask[k, r, l] = (k == idx[r, l]).
    # The sum over the leading axis lowers to plain VPU adds over (R, L) slabs.
    # NOTE: out-of-range / negative indices match no row and silently yield 0.0.
    row_ids = lax.broadcasted_iota(jnp.int32, (n_pad, R, L), 0)
    mask = row_ids == idx[None, :, :]
    vals = jnp.where(mask, table[:, None, :], jnp.float32(0.0))
    o_ref[...] = jnp.sum(vals, axis=0).astype(o_ref.dtype)


def one_linear_forward(weight, values, *, lane=512, max_block_rows=256,
                       onehot_budget_bytes=4 << 20):
    """Pallas implementation of OneLinear.forward(values) = data_bias(values).squeeze()."""
    out_dtype = weight.dtype
    n = weight.shape[0]
    vshape = values.shape
    B = math.prod(vshape) if vshape else 1

    n_pad = ((n + 7) // 8) * 8

    # Lane width: multiple of 128, no wider than needed, capped at `lane`.
    L = max(128, min(lane, ((B + 127) // 128) * 128))
    total_rows = pl.cdiv(B, L)

    # Rows per block: multiple of 8, big enough to amortize per-step pipeline
    # overhead, small enough that the (n_pad, R, L) f32 one-hot intermediate
    # fits comfortably in VMEM on every chip generation (incl. v7x's 64 MiB).
    rows_budget = max(8, (onehot_budget_bytes // (4 * n_pad * L)) // 8 * 8)
    R = min(max_block_rows, rows_budget, ((total_rows + 7) // 8) * 8)
    R = max(8, (R // 8) * 8)
    nb = pl.cdiv(total_rows, R)
    if nb == 1 and total_rows >= 16:
        # Prefer >= 2 blocks so both v7x TensorCores get disjoint output blocks.
        R = max(8, ((pl.cdiv(total_rows, 2) + 7) // 8) * 8)
        nb = pl.cdiv(total_rows, R)

    rows_pad = nb * R
    B_pad = rows_pad * L

    # Lane-dense f32 bias table; padded rows are never selected by the one-hot.
    # TODO(synk): for n beyond a few hundred rows the O(n_pad x block) one-hot
    # turns VALU-bound; switch to a chunked gather / MXU one-hot matmul there.
    table = jnp.zeros((n_pad, L), jnp.float32).at[:n, :].set(
        jnp.broadcast_to(weight.astype(jnp.float32).reshape(n, 1), (n, L)))

    idx_flat = values.reshape(-1).astype(jnp.int32)
    if B_pad != B:
        # TODO(synk): mask the ragged tail in-kernel instead of this padding copy
        # to keep end-to-end HBM traffic at the ~8 B/element floor.
        idx_flat = jnp.pad(idx_flat, (0, B_pad - B))
    idx2 = idx_flat.reshape(rows_pad, L)

    out = pl.pallas_call(
        _one_linear_kernel,
        out_shape=jax.ShapeDtypeStruct((rows_pad, L), out_dtype),
        grid_spec=pltpu.PrefetchScalarGridSpec(
            num_scalar_prefetch=0,
            grid=(nb,),
            in_specs=[
                pl.BlockSpec((R, L), lambda b: (b, 0)),       # dense index block
                pl.BlockSpec((n_pad, L), lambda b: (0, 0)),   # resident bias table
            ],
            out_specs=pl.BlockSpec((R, L), lambda b: (b, 0)),
        ),
        compiler_params=pltpu.CompilerParams(
            dimension_semantics=("parallel",),
            vmem_limit_bytes=32 * 1024 * 1024),
    )(idx2, table)

    d_bias = out.reshape(-1)[:B].reshape(vshape + (1,))
    # torch .squeeze(): drop every size-1 dim (so B == 1 returns a 0-d scalar).
    return jnp.squeeze(d_bias)


def one_linear_reference(weight, values):
    """Pure-JAX reference matching the PyTorch semantics."""
    return jnp.squeeze(weight[values])


if __name__ == "__main__":
    n, B = 16, 8

    key = jax.random.PRNGKey(0)
    kw, kv = jax.random.split(key)

    # nn.Embedding default init is N(0, 1); init_embedding() scales by 0.001.
    weight = 0.001 * jax.random.normal(kw, (n, 1), dtype=jnp.float32)
    values = jax.random.randint(kv, (B,), 0, n, dtype=jnp.int32)

    out = jax.block_until_ready(one_linear_forward(weight, values))
    ref = one_linear_reference(weight, values)

    assert out.shape == (B,), out.shape
    assert out.dtype == weight.dtype, out.dtype
    assert jnp.allclose(out, ref, atol=1e-6, rtol=1e-6), (out, ref)

    print("KERNEL_OK")
</pallas_src>

<mosaic_0001>
module attributes {stable_mosaic.version = 11 : i64} {
  func.func @_one_linear_kernel(%arg0: i32, %arg1: memref<8x128xi32, #tpu.memory_space<vmem>>, %arg2: memref<16x128xf32, #tpu.memory_space<vmem>>, %arg3: memref<8x128xf32, #tpu.memory_space<vmem>>) attributes {dimension_semantics = [#tpu.dimension_semantics<parallel>], iteration_bounds = array<i64: 1>, scalar_prefetch = 0 : i64, scratch_operands = 0 : i64, tpu.core_type = #tpu.core_type<tc>, window_params = [{transform_indices = @transform_0, window_bounds = array<i64: 8, 128>}, {pipeline_mode = #tpu.pipeline_mode<synchronous>, transform_indices = @transform_1, window_bounds = array<i64: 16, 128>}, {transform_indices = @transform_2, window_bounds = array<i64: 8, 128>}]} {
    %c0 = arith.constant 0 : index
    %c0_0 = arith.constant 0 : index
    %0 = vector.load %arg1[%c0, %c0_0] : memref<8x128xi32, #tpu.memory_space<vmem>>, vector<8x128xi32>
    %c0_1 = arith.constant 0 : index
    %c0_2 = arith.constant 0 : index
    %1 = vector.load %arg2[%c0_1, %c0_2] : memref<16x128xf32, #tpu.memory_space<vmem>>, vector<16x128xf32>
    %2 = tpu.iota {dimensions = array<i32: 0>} : vector<16x8x128xi32>
    %3 = vector.shape_cast %0 : vector<8x128xi32> to vector<1x8x128xi32>
    %4 = vector.broadcast %3 : vector<1x8x128xi32> to vector<16x8x128xi32>
    %5 = arith.cmpi eq, %2, %4 : vector<16x8x128xi32>
    %6 = vector.shape_cast %1 : vector<16x128xf32> to vector<16x1x128xf32>
    %cst = arith.constant 0.000000e+00 : f32
    %7 = vector.shape_cast %6 : vector<16x1x128xf32> to vector<16x1x128xf32>
    %8 = vector.broadcast %7 : vector<16x1x128xf32> to vector<16x8x128xf32>
    %9 = vector.broadcast %cst : f32 to vector<16x8x128xf32>
    %10 = arith.select %5, %8, %9 : vector<16x8x128xi1>, vector<16x8x128xf32>
    %cst_3 = arith.constant dense<0.000000e+00> : vector<8x128xf32>
    %11 = vector.multi_reduction <add>, %10, %cst_3 [0] : vector<16x8x128xf32> to vector<8x128xf32>
    %c0_4 = arith.constant 0 : index
    %c0_5 = arith.constant 0 : index
    %12 = vector.load %arg3[%c0_4, %c0_5] : memref<8x128xf32, #tpu.memory_space<vmem>>, vector<8x128xf32>
    tpu.vector_store %arg3[%c0_4, %c0_5], %11 {strides = array<i32>} : memref<8x128xf32, #tpu.memory_space<vmem>>, vector<8x128xf32>,
    return
  }
  func.func @transform_0(%arg0: i32) -> (i32, i32) {
    %c0_i32 = arith.constant 0 : i32
    %c0_i32_0 = arith.constant 0 : i32
    return %arg0, %c0_i32 : i32, i32
  }
  func.func @transform_1(%arg0: i32) -> (i32, i32) {
    %c0_i32 = arith.constant 0 : i32
    %c0_i32_0 = arith.constant 0 : i32
    %c0_i32_1 = arith.constant 0 : i32
    return %c0_i32, %c0_i32_0 : i32, i32
  }
  func.func @transform_2(%arg0: i32) -> (i32, i32) {
    %c0_i32 = arith.constant 0 : i32
    %c0_i32_0 = arith.constant 0 : i32
    return %arg0, %c0_i32 : i32, i32
  }
}

</mosaic_0001>

<llo_original>
// kernel: tpu_custom_call.1
$region0: #{tpu_custom_call.1}
  #allocation0 [shape = 'u32[]', space=smem, size = 0x4, offset = 0x4, fixed_abs, tag = 'smem constant byte address 0x4 - core index']
  #allocation1 [shape = 'u32[144,128]{1,0:T(1,128)}', space=vmem, size = 0x12000, scoped, tag = 'internal scratch']
  %s0 = inlined_call_operand.hbm [shape: s32[8,128], index: 0, kind: input, shape index: {}]
  %s1 = inlined_call_operand.hbm [shape: f32[16,128], index: 1, kind: input, shape index: {}]
  %s2 = inlined_call_operand.hbm [shape: f32[8,128], index: 2, kind: output, shape index: {}]
  %s3 = sld [smem:[#allocation0]]
  $region26: #{tpu_custom_call.1} parent=0
    _
  %s5 = ssub.s32 1, %s3
  %s6 = scalar_select 0, %s5, %s3
  $region1: #{tpu_custom_call.1} parent=0
    #allocation2 [shape = 'u8[4096]{0}', space=vmem, size = 0x1000, scoped, tag = 'input window, operand 0, single buffered']
    #allocation3 [shape = 's32[1]{0}', space=sflag, size = 0x4, scoped, tag = 'scoped memory for tpu_custom_call.1']
    #allocation4 [shape = 's32[1]{0}', space=sflag, size = 0x4, scoped, tag = 'scoped memory for tpu_custom_call.1']
    #allocation5 [shape = 'u8[8192]{0}', space=vmem, size = 0x2000, scoped, tag = 'input window, operand 1, single buffered']
    #allocation6 [shape = 's32[1]{0}', space=sflag, size = 0x4, scoped, tag = 'scoped memory for tpu_custom_call.1']
    #allocation7 [shape = 'u8[4096]{0}', space=vmem, size = 0x1000, scoped, tag = 'output window, operand 0, single buffered']
    %7 = vsyncpa [#allocation3], 0
    %8 = vsyncpa [#allocation6], 0
    %9 = vsyncpa [#allocation4], 0
    // Predicated region
    $region2: #{tpu_custom_call.1} parent=1 // pred_check
      _
    $region3: #{tpu_custom_call.1} parent=1 // pred_check_branch
      %11 = sbr.rel (0) target = $region5
    $region4: #{tpu_custom_call.1} parent=1 // pred_region
      %s13 = ssub.s32 128, 128
      %14 = vsyncadd [#allocation3], %s13
      %s16 = sshll.u32 [#allocation2], 4
      %s17 = int_to_ptr.vmem [resolvable:$true] %s16
      %19 = dma.hbm_to_vmem [thread:$0]  %s0, 128, %s17, [#allocation3]
    $region5: #{tpu_custom_call.1} parent=1 // pred_fallthru
      _
    // Predicated region
    $region6: #{tpu_custom_call.1} parent=1 // pred_check
      _
    $region7: #{tpu_custom_call.1} parent=1 // pred_check_branch
      %21 = sbr.rel (0) target = $region9
    $region8: #{tpu_custom_call.1} parent=1 // pred_region
      %s23 = ssub.s32 256, 256
      %24 = vsyncadd [#allocation6], %s23
      %s25 = sshll.u32 [#allocation5], 4
      %s26 = int_to_ptr.vmem [resolvable:$true] %s25
      %31 = dma.hbm_to_vmem [thread:$0]  %s1, 256, %s26, [#allocation6], 128, 128, 8
    $region9: #{tpu_custom_call.1} parent=1 // pred_fallthru
      _
    // Predicated region
    $region10: #{tpu_custom_call.1} parent=1 // pred_check
      _
    $region11: #{tpu_custom_call.1} parent=1 // pred_check_branch
      %33 = sbr.rel (0) target = $region13
    $region12: #{tpu_custom_call.1} parent=1 // pred_region
      %34 = dma.done [#allocation3], 128
    $region13: #{tpu_custom_call.1} parent=1 // pred_fallthru
      _
    // Predicated region
    $region14: #{tpu_custom_call.1} parent=1 // pred_check
      _
    $region15: #{tpu_custom_call.1} parent=1 // pred_check_branch
      %36 = sbr.rel (0) target = $region17
    $region16: #{tpu_custom_call.1} parent=1 // pred_region
      %37 = dma.done [#allocation6], 256
    $region17: #{tpu_custom_call.1} parent=1 // pred_fallthru
      _
    %v38 = vld [vmem:[#allocation2] sm:$0xff]
    %v39 = vld [vmem:[#allocation5] sm:$0xff]
    %v40 = vld [vmem:[#allocation5 + $0x8] sm:$0xff]
    %vm41 = vcmp.eq.s32.totalorder %v38, 0
    %vm42 = vcmp.eq.s32.totalorder %v38, 1
    %vm43 = vcmp.eq.s32.totalorder %v38, 2
    %vm44 = vcmp.eq.s32.totalorder %v38, 3
    %vm45 = vcmp.eq.s32.totalorder %v38, 4
    %vm46 = vcmp.eq.s32.totalorder %v38, 5
    %vm47 = vcmp.eq.s32.totalorder %v38, 6
    %vm48 = vcmp.eq.s32.totalorder %v38, 7
    %vm49 = vcmp.eq.s32.totalorder %v38, 8
    %vm50 = vcmp.eq.s32.totalorder %v38, 9
    %vm51 = vcmp.eq.s32.totalorder %v38, 10
    %vm52 = vcmp.eq.s32.totalorder %v38, 11
    %vm53 = vcmp.eq.s32.totalorder %v38, 12
    %vm54 = vcmp.eq.s32.totalorder %v38, 13
    %vm55 = vcmp.eq.s32.totalorder %v38, 14
    %vm56 = vcmp.eq.s32.totalorder %v38, 15
    %v59 = vcombine.high %v39, %v39
    %v61 = vunpack.c.l.s4 1966171168
    %v62 = vunpack.c.0.s8 %v61
    %v63 = vlaneseq
    %v64 = vshrl.u32 %v63, 7
    %v65 = vsub.s32 %v62, %v64
    %v66 = vrot.slane %v39, %v65
    %v68 = vunpack.c.l.s4 1966171168
    %v69 = vunpack.c.0.s8 %v68
    %v70 = vlaneseq
    %v71 = vshrl.u32 %v70, 7
    %v72 = vsub.s32 %v69, %v71
    %v73 = vrot.slane %v59, %v72
    %v74 = vcombine.high %v66, %v66
    %v75 = vcombine.high %v73, %v73
    %v77 = vunpack.c.l.s4 1966171168
    %v78 = vunpack.c.0.s8 %v77
    %v79 = vlaneseq
    %v80 = vshrl.u32 %v79, 7
    %v81 = vsub.s32 %v78, %v80
    %v82 = vrot.slane %v66, %v81
    %v84 = vunpack.c.l.s4 1966171168
    %v85 = vunpack.c.0.s8 %v84
    %v86 = vlaneseq
    %v87 = vshrl.u32 %v86, 7
    %v88 = vsub.s32 %v85, %v87
    %v89 = vrot.slane %v73, %v88
    %v91 = vunpack.c.l.s4 1966171168
    %v92 = vunpack.c.0.s8 %v91
    %v93 = vlaneseq
    %v94 = vshrl.u32 %v93, 7
    %v95 = vsub.s32 %v92, %v94
    %v96 = vrot.slane %v74, %v95
    %v98 = vunpack.c.l.s4 1966171168
    %v99 = vunpack.c.0.s8 %v98
    %v100 = vlaneseq
    %v101 = vshrl.u32 %v100, 7
    %v102 = vsub.s32 %v99, %v101
    %v103 = vrot.slane %v75, %v102
    %v104 = vcombine.high %v82, %v82
    %v105 = vcombine.high %v89, %v89
    %v106 = vcombine.high %v96, %v96
    %v107 = vcombine.high %v103, %v103
    %v108 = vcombine.high %v40, %v40
    %v110 = vunpack.c.l.s4 1966171168
    %v111 = vunpack.c.0.s8 %v110
    %v112 = vlaneseq
    %v113 = vshrl.u32 %v112, 7
    %v114 = vsub.s32 %v111, %v113
    %v115 = vrot.slane %v40, %v114
    %v117 = vunpack.c.l.s4 1966171168
    %v118 = vunpack.c.0.s8 %v117
    %v119 = vlaneseq
    %v120 = vshrl.u32 %v119, 7
    %v121 = vsub.s32 %v118, %v120
    %v122 = vrot.slane %v108, %v121
    %v123 = vcombine.high %v115, %v115
    %v124 = vcombine.high %v122, %v122
    %v126 = vunpack.c.l.s4 1966171168
    %v127 = vunpack.c.0.s8 %v126
    %v128 = vlaneseq
    %v129 = vshrl.u32 %v128, 7
    %v130 = vsub.s32 %v127, %v129
    %v131 = vrot.slane %v115, %v130
    %v133 = vunpack.c.l.s4 1966171168
    %v134 = vunpack.c.0.s8 %v133
    %v135 = vlaneseq
    %v136 = vshrl.u32 %v135, 7
    %v137 = vsub.s32 %v134, %v136
    %v138 = vrot.slane %v122, %v137
    %v140 = vunpack.c.l.s4 1966171168
    %v141 = vunpack.c.0.s8 %v140
    %v142 = vlaneseq
    %v143 = vshrl.u32 %v142, 7
    %v144 = vsub.s32 %v141, %v143
    %v145 = vrot.slane %v123, %v144
    %v147 = vunpack.c.l.s4 1966171168
    %v148 = vunpack.c.0.s8 %v147
    %v149 = vlaneseq
    %v150 = vshrl.u32 %v149, 7
    %v151 = vsub.s32 %v148, %v150
    %v152 = vrot.slane %v124, %v151
    %v153 = vcombine.high %v131, %v131
    %v154 = vcombine.high %v138, %v138
    %v155 = vcombine.high %v145, %v145
    %v156 = vcombine.high %v152, %v152
    %v157 = vlaneseq
    %v158 = vshrl.u32 %v157, 7
    %v159 = vsub.s32 0, %v158
    %v160 = vrot.slane %v82, %v159
    %v161 = vlaneseq
    %v162 = vshrl.u32 %v161, 7
    %v163 = vsub.s32 0, %v162
    %v164 = vrot.slane %v96, %v163
    %v165 = vlaneseq
    %v166 = vshrl.u32 %v165, 7
    %v167 = vsub.s32 0, %v166
    %v168 = vrot.slane %v104, %v167
    %v169 = vlaneseq
    %v170 = vshrl.u32 %v169, 7
    %v171 = vsub.s32 0, %v170
    %v172 = vrot.slane %v106, %v171
    %v173 = vlaneseq
    %v174 = vshrl.u32 %v173, 7
    %v175 = vsub.s32 0, %v174
    %v176 = vrot.slane %v89, %v175
    %v177 = vlaneseq
    %v178 = vshrl.u32 %v177, 7
    %v179 = vsub.s32 0, %v178
    %v180 = vrot.slane %v103, %v179
    %v181 = vlaneseq
    %v182 = vshrl.u32 %v181, 7
    %v183 = vsub.s32 0, %v182
    %v184 = vrot.slane %v105, %v183
    %v185 = vlaneseq
    %v186 = vshrl.u32 %v185, 7
    %v187 = vsub.s32 0, %v186
    %v188 = vrot.slane %v107, %v187
    %v189 = vlaneseq
    %v190 = vshrl.u32 %v189, 7
    %v191 = vsub.s32 0, %v190
    %v192 = vrot.slane %v131, %v191
    %v193 = vlaneseq
    %v194 = vshrl.u32 %v193, 7
    %v195 = vsub.s32 0, %v194
    %v196 = vrot.slane %v145, %v195
    %v197 = vlaneseq
    %v198 = vshrl.u32 %v197, 7
    %v199 = vsub.s32 0, %v198
    %v200 = vrot.slane %v153, %v199
    %v201 = vlaneseq
    %v202 = vshrl.u32 %v201, 7
    %v203 = vsub.s32 0, %v202
    %v204 = vrot.slane %v155, %v203
    %v205 = vlaneseq
    %v206 = vshrl.u32 %v205, 7
    %v207 = vsub.s32 0, %v206
    %v208 = vrot.slane %v138, %v207
    %v209 = vlaneseq
    %v210 = vshrl.u32 %v209, 7
    %v211 = vsub.s32 0, %v210
    %v212 = vrot.slane %v152, %v211
    %v213 = vlaneseq
    %v214 = vshrl.u32 %v213, 7
    %v215 = vsub.s32 0, %v214
    %v216 = vrot.slane %v154, %v215
    %v217 = vlaneseq
    %v218 = vshrl.u32 %v217, 7
    %v219 = vsub.s32 0, %v218
    %v220 = vrot.slane %v156, %v219
    %v237 = vsel %vm41, %v160, 0.0
    %v238 = vsel %vm42, %v164, 0.0
    %v239 = vsel %vm43, %v168, 0.0
    %v240 = vsel %vm44, %v172, 0.0
    %v241 = vsel %vm45, %v176, 0.0
    %v242 = vsel %vm46, %v180, 0.0
    %v243 = vsel %vm47, %v184, 0.0
    %v244 = vsel %vm48, %v188, 0.0
    %v245 = vsel %vm49, %v192, 0.0
    %v246 = vsel %vm50, %v196, 0.0
    %v247 = vsel %vm51, %v200, 0.0
    %v248 = vsel %vm52, %v204, 0.0
    %v249 = vsel %vm53, %v208, 0.0
    %v250 = vsel %vm54, %v212, 0.0
    %v251 = vsel %vm55, %v216, 0.0
    %v252 = vsel %vm56, %v220, 0.0
    %v253 = vadd.f32 %v237, %v238
    %v254 = vadd.f32 %v253, %v239
    %v255 = vadd.f32 %v254, %v240
    %v256 = vadd.f32 %v255, %v241
    %v257 = vadd.f32 %v256, %v242
    %v258 = vadd.f32 %v257, %v243
    %v259 = vadd.f32 %v258, %v244
    %v260 = vadd.f32 %v259, %v245
    %v261 = vadd.f32 %v260, %v246
    %v262 = vadd.f32 %v261, %v247
    %v263 = vadd.f32 %v262, %v248
    %v264 = vadd.f32 %v263, %v249
    %v265 = vadd.f32 %v264, %v250
    %v266 = vadd.f32 %v265, %v251
    %v267 = vadd.f32 %v266, %v252
    %268 = vst [vmem:[#allocation7] sm:$0xff] %v267
    // Predicated region
    $region18: #{tpu_custom_call.1} parent=1 // pred_check
      _
    $region19: #{tpu_custom_call.1} parent=1 // pred_check_branch
      %270 = sbr.rel (0) target = $region21
    $region20: #{tpu_custom_call.1} parent=1 // pred_region
      %s272 = ssub.s32 128, 128
      %273 = vsyncadd [#allocation4], %s272
      %s275 = sshll.u32 [#allocation7], 4
      %s276 = int_to_ptr.vmem [resolvable:$true] %s275
      %278 = dma.vmem_to_hbm [thread:$0]  %s276, 128, %s2, [#allocation4]
    $region21: #{tpu_custom_call.1} parent=1 // pred_fallthru
      _
    // Predicated region
    $region22: #{tpu_custom_call.1} parent=1 // pred_check
      _
    $region23: #{tpu_custom_call.1} parent=1 // pred_check_branch
      %280 = sbr.rel (0) target = $region25
    $region24: #{tpu_custom_call.1} parent=1 // pred_region
      %281 = dma.done [#allocation4], 128
    $region25: #{tpu_custom_call.1} parent=1 // pred_fallthru
      _
    %282 = vsyncpa [#allocation3], 1
    %283 = vsyncpa [#allocation6], 1
    %284 = vsyncpa [#allocation4], 1

</llo_original>
